<compile_context>
chip_gen: v7x
topology: tpu7x:2x2x1
jax: 0.10.0
libtpu: 0.0.40
codegen_flags: <defaults>
</compile_context>

<pallas_src>
import jax
import jax.numpy as jnp
from jax.experimental import pallas as pl
from jax.experimental.pallas import tpu as pltpu


def _round_up(x, m):
    return (x + m - 1) // m * m


def _cdiv(a, b):
    return (a + b - 1) // b


def _vmem_budget_bytes():
    """Generation-aware VMEM ceiling (leave ~25% headroom for Pallas internals)."""
    try:
        cap = pltpu.get_tpu_info().vmem_capacity_bytes   # 128 MiB v5e/v6e, 64 MiB v7x
    except Exception:
        cap = 64 * 1024 * 1024
    return int(cap) * 3 // 4


def _pick_k_tiling(D, tk):
    """Return (tk_eff, Dp) with Dp % tk_eff == 0 and the K reduction kept exact."""
    tk = max(128, tk)
    if D <= tk:
        return D, D                                   # single K step, full-dim block
    # largest 128-multiple divisor of D that is <= tk (but never auto-drop below 512)
    for cand in range((tk // 128) * 128, 127, -128):
        if D % cand == 0 and cand >= min(512, tk):
            return cand, D
    # no clean large divisor: zero-pad D up to a multiple of 512 (result stays exact)
    Dp = _round_up(D, 512)
    tk_eff = 512
    for cand in range((tk // 512) * 512, 511, -512):
        if Dp % cand == 0:
            tk_eff = cand
            break
    return tk_eff, Dp


def _weight_block_spec(tk_eff, tn_eff, deep):
    index_map = lambda i, j, k: (k, j)
    if deep:
        # Decode is weight-streaming bound: 3-deep weight pipeline hides DMA jitter.
        try:
            return pl.BlockSpec((tk_eff, tn_eff), index_map,
                                pipeline_mode=pl.Buffered(3))
        except Exception:
            pass
    return pl.BlockSpec((tk_eff, tn_eff), index_map)


def _matmul_kernel(*refs):
    # refs = (x, w_t[, bias], out, acc)
    if len(refs) == 5:
        x_ref, w_ref, b_ref, o_ref, acc_ref = refs
    else:
        x_ref, w_ref, o_ref, acc_ref = refs
        b_ref = None

    k = pl.program_id(2)

    @pl.when(k == 0)
    def _():
        acc_ref[...] = jnp.zeros_like(acc_ref)

    # x tile (tm, tk) @ w_t tile (tk, tn): canonical MXU feed, native dtype,
    # fp32 accumulate. No per-step RHS relayout.
    acc_ref[...] += jnp.dot(x_ref[...], w_ref[...],
                            preferred_element_type=jnp.float32)

    @pl.when(k == pl.num_programs(2) - 1)
    def _():
        acc = acc_ref[...]
        if b_ref is not None:
            acc = acc + b_ref[...].astype(jnp.float32)
        o_ref[...] = acc.astype(o_ref.dtype)


class RowParallelLinear:
    """Pallas port of RowParallelLinear (world_size=1): y = x @ weight.T (+ bias).

    Weight prep (transpose to [Dp, Np], zero-pad K and N) is done once here, NOT per
    forward call. `weight` is in PyTorch layout [out_features, in_features].
    """

    def __init__(self, weight, bias=None, *, tm=512, tn=512, tk=2048):
        assert tm % 8 == 0 and tn % 128 == 0 and tk % 128 == 0, \
            "tiles must be (8,128) aligned"
        self.N, self.D = weight.shape
        self.tm, self.tn = tm, tn
        self.tk_eff, self.Dp = _pick_k_tiling(self.D, tk)
        self.Np = _round_up(self.N, 128)               # lane-dense output/weight blocks

        w = weight
        if self.Dp != self.D or self.Np != self.N:
            w = jnp.pad(w, ((0, self.Np - self.N), (0, self.Dp - self.D)))
        self.w_t = jnp.transpose(w, (1, 0))            # [Dp, Np], one-time cost

        self.bias = None
        if bias is not None:
            b = bias.astype(jnp.float32)
            if self.Np != self.N:
                b = jnp.pad(b, (0, self.Np - self.N))
            self.bias = b.reshape(1, self.Np)

    def __call__(self, x):
        assert x.shape[-1] == self.D, "in_features mismatch"
        out_dtype = x.dtype
        x2 = x.reshape(-1, self.D)
        T = x2.shape[0]
        if self.Dp != self.D:
            x2 = jnp.pad(x2, ((0, 0), (0, self.Dp - self.D)))

        # ---- tile clamping ----
        tm_eff = self.tm if T > self.tm else T          # full-dim block is always legal
        tn_eff = min(self.tn, self.Np)                  # Np is a multiple of 128
        m_tiles = _cdiv(T, tm_eff)
        # Decode (single M tile): keep >=2 N tiles so both v7x TensorCores get work.
        if m_tiles == 1 and self.Np >= 256:
            tn_eff = min(tn_eff, max(256, _round_up(_cdiv(self.Np, 2), 128)))
        n_tiles = _cdiv(self.Np, tn_eff)
        k_tiles = self.Dp // self.tk_eff
        grid = (m_tiles, n_tiles, k_tiles)

        deep_w = (m_tiles == 1) and (n_tiles * k_tiles >= 3)

        in_specs = [
            pl.BlockSpec((tm_eff, self.tk_eff), lambda i, j, k: (i, k)),
            _weight_block_spec(self.tk_eff, tn_eff, deep_w),
        ]
        args = [x2, self.w_t]
        if self.bias is not None:
            in_specs.append(pl.BlockSpec((1, tn_eff), lambda i, j, k: (0, j)))
            args.append(self.bias)

        # ---- VMEM budget (generation-aware) ----
        in_isz = jnp.dtype(x.dtype).itemsize
        w_isz = jnp.dtype(self.w_t.dtype).itemsize
        out_isz = jnp.dtype(out_dtype).itemsize
        w_bufs = 3 if deep_w else 2
        vmem_needed = (2 * tm_eff * self.tk_eff * in_isz
                       + w_bufs * self.tk_eff * tn_eff * w_isz
                       + 2 * tm_eff * tn_eff * out_isz
                       + tm_eff * tn_eff * 4
                       + (2 * tn_eff * 4 if self.bias is not None else 0))
        ceiling = _vmem_budget_bytes()
        assert vmem_needed <= ceiling, (
            f"tile footprint {vmem_needed / 2**20:.1f} MiB exceeds VMEM budget "
            f"{ceiling / 2**20:.1f} MiB; pass smaller tm/tn/tk")
        vmem_limit = int(min(ceiling, max(vmem_needed + vmem_needed // 4,
                                          32 * 1024 * 1024)))

        cost = pl.CostEstimate(
            flops=int(2 * T * self.Np * self.Dp),
            transcendentals=0,
            bytes_accessed=int(n_tiles * T * self.Dp * in_isz
                               + m_tiles * self.Dp * self.Np * w_isz
                               + T * self.Np * out_isz),
        )

        out = pl.pallas_call(
            _matmul_kernel,
            out_shape=jax.ShapeDtypeStruct((T, self.Np), out_dtype),
            grid_spec=pltpu.PrefetchScalarGridSpec(
                num_scalar_prefetch=0,
                grid=grid,
                in_specs=in_specs,
                out_specs=pl.BlockSpec((tm_eff, tn_eff), lambda i, j, k: (i, j)),
                scratch_shapes=[pltpu.VMEM((tm_eff, tn_eff), jnp.float32)],
            ),
            compiler_params=pltpu.CompilerParams(
                dimension_semantics=("parallel", "parallel", "arbitrary"),
                vmem_limit_bytes=vmem_limit,
            ),
            cost_estimate=cost,
        )(*args)

        if self.Np != self.N:
            out = out[:, : self.N]
        return out.reshape(x.shape[:-1] + (self.N,))


def row_parallel_linear(x, weight, bias=None, *, tm=512, tn=512, tk=2048):
    """One-shot functional form. For repeated forwards, build RowParallelLinear once
    so the weight transpose/padding is not paid per call."""
    return RowParallelLinear(weight, bias, tm=tm, tn=tn, tk=tk)(x)


if __name__ == "__main__":
    key = jax.random.PRNGKey(0)
    kx, kw, kb = jax.random.split(key, 3)

    # small shapes consistent with the module: batch=2, seq=8, in_features=256, out_features=48
    B, S, D, N = 2, 8, 256, 48
    x = jax.random.normal(kx, (B, S, D), dtype=jnp.float32).astype(jnp.bfloat16)
    weight = (jax.random.normal(kw, (N, D), dtype=jnp.float32) * 0.05).astype(jnp.bfloat16)
    bias = (jax.random.normal(kb, (N,), dtype=jnp.float32) * 0.1).astype(jnp.bfloat16)

    def ref(x, w, b=None):
        y = jnp.dot(x.reshape(-1, x.shape[-1]).astype(jnp.float32),
                    w.T.astype(jnp.float32))
        if b is not None:
            y = y + b.astype(jnp.float32)
        return y.reshape(x.shape[:-1] + (w.shape[0],)).astype(x.dtype)

    layer = RowParallelLinear(weight)           # module default: bias=False
    layer_b = RowParallelLinear(weight, bias)   # bias path
    y = layer(x)
    y_b = layer_b(x)
    # tk=128 on D=256 -> 2 reduction steps: exercises accumulator init/finalize phases.
    y_mk = row_parallel_linear(x, weight, bias, tk=128)
    jax.block_until_ready((y, y_b, y_mk))

    r, r_b = ref(x, weight), ref(x, weight, bias)
    assert y.shape == (B, S, N) and y.dtype == x.dtype
    for got, want, tag in ((y, r, "no-bias"), (y_b, r_b, "bias"), (y_mk, r_b, "multi-K")):
        assert jnp.allclose(got.astype(jnp.float32), want.astype(jnp.float32),
                            atol=5e-2, rtol=5e-2), f"{tag} output mismatch"

    print("KERNEL_OK")
</pallas_src>

<mosaic_0001>
module attributes {stable_mosaic.version = 11 : i64} {
  func.func @_matmul_kernel(%arg0: i32, %arg1: i32, %arg2: i32, %arg3: memref<16x256xbf16, #tpu.memory_space<vmem>>, %arg4: memref<256x128xbf16, #tpu.memory_space<vmem>>, %arg5: memref<16x128xbf16, #tpu.memory_space<vmem>>, %arg6: memref<16x128xf32, #tpu.memory_space<vmem>>) attributes {dimension_semantics = [#tpu.dimension_semantics<parallel>, #tpu.dimension_semantics<parallel>, #tpu.dimension_semantics<arbitrary>], iteration_bounds = array<i64: 1, 1, 1>, scalar_prefetch = 0 : i64, scratch_operands = 1 : i64, tpu.core_type = #tpu.core_type<tc>, window_params = [{transform_indices = @transform_0, window_bounds = array<i64: 16, 256>}, {transform_indices = @transform_1, window_bounds = array<i64: 256, 128>}, {transform_indices = @transform_2, window_bounds = array<i64: 16, 128>}]} {
    %c0_i32 = arith.constant 0 : i32
    %0 = arith.cmpi eq, %arg2, %c0_i32 : i32
    %1 = arith.extui %0 : i1 to i32
    %c0_i32_0 = arith.constant 0 : i32
    %2 = arith.cmpi ne, %1, %c0_i32_0 : i32
    scf.if %2 {
      %cst_10 = arith.constant 0.000000e+00 : f32
      %12 = vector.broadcast %cst_10 : f32 to vector<16x128xf32>
      %c0_11 = arith.constant 0 : index
      %c0_12 = arith.constant 0 : index
      %13 = vector.load %arg6[%c0_11, %c0_12] : memref<16x128xf32, #tpu.memory_space<vmem>>, vector<16x128xf32>
      tpu.vector_store %arg6[%c0_11, %c0_12], %12 {strides = array<i32>} : memref<16x128xf32, #tpu.memory_space<vmem>>, vector<16x128xf32>,
    } else {
    }
    %c0 = arith.constant 0 : index
    %c0_1 = arith.constant 0 : index
    %3 = vector.load %arg6[%c0, %c0_1] : memref<16x128xf32, #tpu.memory_space<vmem>>, vector<16x128xf32>
    %c0_2 = arith.constant 0 : index
    %c0_3 = arith.constant 0 : index
    %4 = vector.load %arg3[%c0_2, %c0_3] : memref<16x256xbf16, #tpu.memory_space<vmem>>, vector<16x256xbf16>
    %c0_4 = arith.constant 0 : index
    %c0_5 = arith.constant 0 : index
    %5 = vector.load %arg4[%c0_4, %c0_5] : memref<256x128xbf16, #tpu.memory_space<vmem>>, vector<256x128xbf16>
    %cst = arith.constant dense<0.000000e+00> : vector<16x128xf32>
    %6 = tpu.matmul %4, %5, %cst {dimension_numbers = #tpu.dot_dimension_numbers<[1], [0], [0], [1], [0, 0, 1, 1], [], []>} : vector<16x256xbf16>, vector<256x128xbf16>, vector<16x128xf32> -> vector<16x128xf32>
    %7 = arith.addf %3, %6 : vector<16x128xf32>
    %c0_6 = arith.constant 0 : index
    %c0_7 = arith.constant 0 : index
    %8 = vector.load %arg6[%c0_6, %c0_7] : memref<16x128xf32, #tpu.memory_space<vmem>>, vector<16x128xf32>
    tpu.vector_store %arg6[%c0_6, %c0_7], %7 {strides = array<i32>} : memref<16x128xf32, #tpu.memory_space<vmem>>, vector<16x128xf32>,
    %c0_i32_8 = arith.constant 0 : i32
    %9 = arith.cmpi eq, %arg2, %c0_i32_8 : i32
    %10 = arith.extui %9 : i1 to i32
    %c0_i32_9 = arith.constant 0 : i32
    %11 = arith.cmpi ne, %10, %c0_i32_9 : i32
    scf.if %11 {
      %c0_10 = arith.constant 0 : index
      %c0_11 = arith.constant 0 : index
      %12 = vector.load %arg6[%c0_10, %c0_11] : memref<16x128xf32, #tpu.memory_space<vmem>>, vector<16x128xf32>
      %13 = arith.truncf %12 : vector<16x128xf32> to vector<16x128xbf16>
      %c0_12 = arith.constant 0 : index
      %c0_13 = arith.constant 0 : index
      %14 = vector.load %arg5[%c0_12, %c0_13] : memref<16x128xbf16, #tpu.memory_space<vmem>>, vector<16x128xbf16>
      tpu.vector_store %arg5[%c0_12, %c0_13], %13 {strides = array<i32>} : memref<16x128xbf16, #tpu.memory_space<vmem>>, vector<16x128xbf16>,
    } else {
    }
    return
  }
  func.func @transform_0(%arg0: i32, %arg1: i32, %arg2: i32) -> (i32, i32) {
    %c0_i32 = arith.constant 0 : i32
    return %arg0, %arg2 : i32, i32
  }
  func.func @transform_1(%arg0: i32, %arg1: i32, %arg2: i32) -> (i32, i32) {
    %c0_i32 = arith.constant 0 : i32
    return %arg2, %arg1 : i32, i32
  }
  func.func @transform_2(%arg0: i32, %arg1: i32, %arg2: i32) -> (i32, i32) {
    %c0_i32 = arith.constant 0 : i32
    return %arg0, %arg1 : i32, i32
  }
}

</mosaic_0001>

<llo_original>
// kernel: tpu_custom_call.1
$region0: #{tpu_custom_call.1}
  #allocation0 [shape = 'u32[]', space=smem, size = 0x4, offset = 0x4, fixed_abs, tag = 'smem constant byte address 0x4 - core index']
  #allocation1 [shape = 'u32[144,128]{1,0:T(1,128)}', space=vmem, size = 0x12000, scoped, tag = 'internal scratch']
  #allocation2 [shape = 'f32[16,128]{1,0:T(8,128)}', space=vmem, size = 0x2000, scoped, tag = 'scratch operand']
  %s0 = inlined_call_operand.hbm [shape: bf16[16,256], index: 0, kind: input, shape index: {}]
  %s1 = inlined_call_operand.hbm [shape: bf16[256,128], index: 1, kind: input, shape index: {}]
  %s2 = inlined_call_operand.hbm [shape: bf16[16,128], index: 2, kind: output, shape index: {}]
  %s3 = sld [smem:[#allocation0]]
  $region34: #{tpu_custom_call.1} parent=0
    _
  %s5 = ssub.s32 1, %s3
  %s6 = scalar_select 0, %s5, %s3
  $region1: #{tpu_custom_call.1} parent=0
    #allocation3 [shape = 'u8[8192]{0}', space=vmem, size = 0x2000, scoped, tag = 'input window, operand 0, single buffered']
    #allocation4 [shape = 's32[1]{0}', space=sflag, size = 0x4, scoped, tag = 'scoped memory for tpu_custom_call.1']
    #allocation5 [shape = 's32[1]{0}', space=sflag, size = 0x4, scoped, tag = 'scoped memory for tpu_custom_call.1']
    #allocation6 [shape = 'u8[65536]{0}', space=vmem, size = 0x10000, scoped, tag = 'input window, operand 1, single buffered']
    #allocation7 [shape = 's32[1]{0}', space=sflag, size = 0x4, scoped, tag = 'scoped memory for tpu_custom_call.1']
    #allocation8 [shape = 'u8[4096]{0}', space=vmem, size = 0x1000, scoped, tag = 'output window, operand 0, single buffered']
    %7 = vsyncpa [#allocation4], 0
    %8 = vsyncpa [#allocation7], 0
    %9 = vsyncpa [#allocation5], 0
    // Predicated region
    $region2: #{tpu_custom_call.1} parent=1 // pred_check
      _
    $region3: #{tpu_custom_call.1} parent=1 // pred_check_branch
      %11 = sbr.rel (0) target = $region5
    $region4: #{tpu_custom_call.1} parent=1 // pred_region
      %s13 = ssub.s32 256, 256
      %14 = vsyncadd [#allocation4], %s13
      %s15 = sshll.u32 [#allocation3], 4
      %s16 = int_to_ptr.vmem [resolvable:$true] %s15
      %21 = dma.hbm_to_vmem [thread:$0]  %s0, 256, %s16, [#allocation4], 128, 128, 8
    $region5: #{tpu_custom_call.1} parent=1 // pred_fallthru
      _
    // Predicated region
    $region6: #{tpu_custom_call.1} parent=1 // pred_check
      _
    $region7: #{tpu_custom_call.1} parent=1 // pred_check_branch
      %23 = sbr.rel (0) target = $region9
    $region8: #{tpu_custom_call.1} parent=1 // pred_region
      %s25 = ssub.s32 2048, 2048
      %26 = vsyncadd [#allocation7], %s25
      %s27 = sshll.u32 [#allocation6], 4
      %s28 = int_to_ptr.vmem [resolvable:$true] %s27
      %33 = dma.hbm_to_vmem [thread:$0]  %s1, 2048, %s28, [#allocation7], 64, 64, 4
    $region9: #{tpu_custom_call.1} parent=1 // pred_fallthru
      _
    // Predicated region
    $region10: #{tpu_custom_call.1} parent=1 // pred_check
      _
    $region11: #{tpu_custom_call.1} parent=1 // pred_check_branch
      %35 = sbr.rel (0) target = $region13
    $region12: #{tpu_custom_call.1} parent=1 // pred_region
      %36 = dma.done [#allocation4], 256
    $region13: #{tpu_custom_call.1} parent=1 // pred_fallthru
      _
    // Predicated region
    $region14: #{tpu_custom_call.1} parent=1 // pred_check
      _
    $region15: #{tpu_custom_call.1} parent=1 // pred_check_branch
      %38 = sbr.rel (0) target = $region17
    $region16: #{tpu_custom_call.1} parent=1 // pred_region
      %39 = dma.done [#allocation7], 2048
    $region17: #{tpu_custom_call.1} parent=1 // pred_fallthru
      _
    %p41 = scmp.eq.s32.totalorder 0, 0
    // Predicated region
    $region18: #{tpu_custom_call.1} parent=1 // pred_check
      %p42 = pneg %p41
    $region19: #{tpu_custom_call.1} parent=1 // pred_check_branch
      %44 = sbr.rel (%p42) target = $region21
    $region20: #{tpu_custom_call.1} parent=1 // pred_region
      %45 = vst [vmem:[#allocation2] sm:$0xff] 0.0
      %46 = vst [vmem:[#allocation2 + $0x8] sm:$0xff] 0.0
    $region21: #{tpu_custom_call.1} parent=1 // pred_fallthru
      _
    %v47 = vld [vmem:[#allocation2] sm:$0xff]
    %v48 = vld [vmem:[#allocation2 + $0x8] sm:$0xff]
    %v49 = vld [vmem:[#allocation3] sm:$0xff]
    %v50 = vld [vmem:[#allocation3 + $0x8] sm:$0xff]
    %v51 = vld [vmem:[#allocation6] sm:$0xf]
    %v52 = vld [vmem:[#allocation6 + $0x4] sm:$0xf]
    %v53 = vld [vmem:[#allocation6 + $0x8] sm:$0xf]
    %v54 = vld [vmem:[#allocation6 + $0xc] sm:$0xf]
    %v55 = vld [vmem:[#allocation6 + $0x10] sm:$0xf]
    %v56 = vld [vmem:[#allocation6 + $0x14] sm:$0xf]
    %v57 = vld [vmem:[#allocation6 + $0x18] sm:$0xf]
    %v58 = vld [vmem:[#allocation6 + $0x1c] sm:$0xf]
    %v59 = vld [vmem:[#allocation6 + $0x20] sm:$0xf]
    %v60 = vld [vmem:[#allocation6 + $0x24] sm:$0xf]
    %v61 = vld [vmem:[#allocation6 + $0x28] sm:$0xf]
    %v62 = vld [vmem:[#allocation6 + $0x2c] sm:$0xf]
    %v63 = vld [vmem:[#allocation6 + $0x30] sm:$0xf]
    %v64 = vld [vmem:[#allocation6 + $0x34] sm:$0xf]
    %v65 = vld [vmem:[#allocation6 + $0x38] sm:$0xf]
    %v66 = vld [vmem:[#allocation6 + $0x3c] sm:$0xf]
    %v67 = vld [vmem:[#allocation6 + $0x40] sm:$0xf]
    %v68 = vld [vmem:[#allocation6 + $0x44] sm:$0xf]
    %v69 = vld [vmem:[#allocation6 + $0x48] sm:$0xf]
    %v70 = vld [vmem:[#allocation6 + $0x4c] sm:$0xf]
    %v71 = vld [vmem:[#allocation6 + $0x50] sm:$0xf]
    %v72 = vld [vmem:[#allocation6 + $0x54] sm:$0xf]
    %v73 = vld [vmem:[#allocation6 + $0x58] sm:$0xf]
    %v74 = vld [vmem:[#allocation6 + $0x5c] sm:$0xf]
    %v75 = vld [vmem:[#allocation6 + $0x60] sm:$0xf]
    %v76 = vld [vmem:[#allocation6 + $0x64] sm:$0xf]
    %v77 = vld [vmem:[#allocation6 + $0x68] sm:$0xf]
    %v78 = vld [vmem:[#allocation6 + $0x6c] sm:$0xf]
    %v79 = vld [vmem:[#allocation6 + $0x70] sm:$0xf]
    %v80 = vld [vmem:[#allocation6 + $0x74] sm:$0xf]
    %v81 = vld [vmem:[#allocation6 + $0x78] sm:$0xf]
    %v82 = vld [vmem:[#allocation6 + $0x7c] sm:$0xf]
    %v85 = vunpack.c.l.b16 %v49
    %v86 = vunpack.c.h.b16 %v49
    %v87 = vunpack.c.l.b16 %v50
    %v88 = vunpack.c.h.b16 %v50
    %v89 = vpack.c.b16 %v87, %v85
    %v90 = vpack.c.b16 %v88, %v86
    %v125 = vunpack.c.l.b16 %v51
    %v126 = vunpack.c.l.b16 %v52
    %v127 = vunpack.c.l.b16 %v53
    %v128 = vunpack.c.l.b16 %v54
    %v129 = vunpack.c.l.b16 %v55
    %v130 = vunpack.c.l.b16 %v56
    %v131 = vunpack.c.l.b16 %v57
    %v132 = vunpack.c.l.b16 %v58
    %v133 = vunpack.c.l.b16 %v59
    %v134 = vunpack.c.l.b16 %v60
    %v135 = vunpack.c.l.b16 %v61
    %v136 = vunpack.c.l.b16 %v62
    %v137 = vunpack.c.l.b16 %v63
    %v138 = vunpack.c.l.b16 %v64
    %v139 = vunpack.c.l.b16 %v65
    %v140 = vunpack.c.l.b16 %v66
    %v141 = vunpack.c.l.b16 %v67
    %v142 = vunpack.c.l.b16 %v68
    %v143 = vunpack.c.l.b16 %v69
    %v144 = vunpack.c.l.b16 %v70
    %v145 = vunpack.c.l.b16 %v71
    %v146 = vunpack.c.l.b16 %v72
    %v147 = vunpack.c.l.b16 %v73
    %v148 = vunpack.c.l.b16 %v74
    %v149 = vunpack.c.l.b16 %v75
    %v150 = vunpack.c.l.b16 %v76
    %v151 = vunpack.c.l.b16 %v77
    %v152 = vunpack.c.l.b16 %v78
    %v153 = vunpack.c.l.b16 %v79
    %v154 = vunpack.c.l.b16 %v80
    %v155 = vunpack.c.l.b16 %v81
    %v156 = vunpack.c.l.b16 %v82
    %v157 = vpack.c.b16 %v126, %v125
    %v158 = vpack.c.b16 %v128, %v127
    %v159 = vpack.c.b16 %v130, %v129
    %v160 = vpack.c.b16 %v132, %v131
    %v161 = vpack.c.b16 %v134, %v133
    %v162 = vpack.c.b16 %v136, %v135
    %v163 = vpack.c.b16 %v138, %v137
    %v164 = vpack.c.b16 %v140, %v139
    %v165 = vpack.c.b16 %v142, %v141
    %v166 = vpack.c.b16 %v144, %v143
    %v167 = vpack.c.b16 %v146, %v145
    %v168 = vpack.c.b16 %v148, %v147
    %v169 = vpack.c.b16 %v150, %v149
    %v170 = vpack.c.b16 %v152, %v151
    %v171 = vpack.c.b16 %v154, %v153
    %v172 = vpack.c.b16 %v156, %v155
    %189 = vmatprep.subr.bf16.mxu0 0
    %190 = vmatpush1.bf16.msra.mxu0 %v157
    %191 = vmatprep.subr.bf16.mxu0 0
    %192 = vmatpush1.bf16.msra.mxu0 %v158
    %193 = vmatprep.subr.bf16.mxu0 0
    %194 = vmatpush1.bf16.msra.mxu0 %v159
    %195 = vmatprep.subr.bf16.mxu0 0
    %196 = vmatpush1.bf16.msra.mxu0 %v160
    %197 = vmatprep.subr.bf16.mxu0 0
    %198 = vmatpush1.bf16.msra.mxu0 %v161
    %199 = vmatprep.subr.bf16.mxu0 0
    %200 = vmatpush1.bf16.msra.mxu0 %v162
    %201 = vmatprep.subr.bf16.mxu0 0
    %202 = vmatpush1.bf16.msra.mxu0 %v163
    %203 = vmatprep.subr.bf16.mxu0 0
    %204 = vmatpush1.bf16.msra.mxu0 %v164
    %205 = vmatprep.subr.bf16.mxu0 0
    %206 = vmatpush1.bf16.msra.mxu0 %v165
    %207 = vmatprep.subr.bf16.mxu0 0
    %208 = vmatpush1.bf16.msra.mxu0 %v166
    %209 = vmatprep.subr.bf16.mxu0 0
    %210 = vmatpush1.bf16.msra.mxu0 %v167
    %211 = vmatprep.subr.bf16.mxu0 0
    %212 = vmatpush1.bf16.msra.mxu0 %v168
    %213 = vmatprep.subr.bf16.mxu0 0
    %214 = vmatpush1.bf16.msra.mxu0 %v169
    %215 = vmatprep.subr.bf16.mxu0 0
    %216 = vmatpush1.bf16.msra.mxu0 %v170
    %217 = vmatprep.subr.bf16.mxu0 0
    %218 = vmatpush1.bf16.msra.mxu0 %v171
    %219 = vmatprep.subr.bf16.mxu0 0
    %220 = vmatpush1.bf16.msra.mxu0 %v172
    %221 = vmatprep.mubr.bf16.mxu0 %v90
    %222 = vmatmul.mubr.bf16.gmra.mrb[0].mxu0 %v89
    %v223 = vpop.f32.mrb[0].mxu0
    %v224 = vadd.f32 0.0, %v223
    %v225 = vpop.f32.mrb[0].mxu0
    %v226 = vpop.f32.mrb[0].mxu0
    %v227 = vadd.f32 0.0, %v226
    %v228 = vpop.f32.mrb[0].mxu0
    %229 = vdwg.mxu0
    %v230 = vadd.f32 %v47, %v224
    %v231 = vadd.f32 %v48, %v227
    %232 = vst [vmem:[#allocation2] sm:$0xff] %v230
    %233 = vst [vmem:[#allocation2 + $0x8] sm:$0xff] %v231
    // Predicated region
    $region22: #{tpu_custom_call.1} parent=1 // pred_check
      %p234 = pneg %p41
    $region23: #{tpu_custom_call.1} parent=1 // pred_check_branch
      %236 = sbr.rel (%p234) target = $region25
    $region24: #{tpu_custom_call.1} parent=1 // pred_region
      %v237 = vld [vmem:[#allocation2] sm:$0xff]
      %v238 = vld [vmem:[#allocation2 + $0x8] sm:$0xff]
      %v239 = vpack.c.bf16 %v238, %v237
      %v241 = vunpack.c.l.b16 %v239
      %v242 = vunpack.c.h.b16 %v239
      %v243 = vpack.c.b16 %v241, %v241
      %v244 = vpack.c.b16 %v242, %v242
      %247 = vst [vmem:[#allocation8] sm:$0xf] %v243
      %248 = vst [vmem:[#allocation8 + $0x4] sm:$0xf] %v244
    $region25: #{tpu_custom_call.1} parent=1 // pred_fallthru
      _
    // Predicated region
    $region26: #{tpu_custom_call.1} parent=1 // pred_check
      _
    $region27: #{tpu_custom_call.1} parent=1 // pred_check_branch
      %250 = sbr.rel (0) target = $region29
    $region28: #{tpu_custom_call.1} parent=1 // pred_region
      %s252 = ssub.s32 128, 128
      %253 = vsyncadd [#allocation5], %s252
      %s254 = sshll.u32 [#allocation8], 4
      %s255 = int_to_ptr.vmem [resolvable:$true] %s254
      %260 = dma.vmem_to_hbm [thread:$0]  %s255, 128, %s2, [#allocation5], 64, 64, 4
    $region29: #{tpu_custom_call.1} parent=1 // pred_fallthru
      _
    // Predicated region
    $region30: #{tpu_custom_call.1} parent=1 // pred_check
      _
    $region31: #{tpu_custom_call.1} parent=1 // pred_check_branch
      %262 = sbr.rel (0) target = $region33
    $region32: #{tpu_custom_call.1} parent=1 // pred_region
      %263 = dma.done [#allocation5], 128
    $region33: #{tpu_custom_call.1} parent=1 // pred_fallthru
      _
    %264 = vsyncpa [#allocation4], 1
    %265 = vsyncpa [#allocation7], 1
    %266 = vsyncpa [#allocation5], 1

</llo_original>
